<compile_context>
chip_gen: v7x
topology: tpu7x:2x2x1
jax: 0.10.0
libtpu: 0.0.40
codegen_flags: <defaults>
</compile_context>

<pallas_src>
import functools

import jax
import jax.numpy as jnp
from jax.experimental import pallas as pl
from jax.experimental.pallas import tpu as pltpu


def _cdiv(a, b):
    return -(-a // b)


def _attention_kernel(w_ref, b_ref, x_ref, o_ref):
    # w_ref : SMEM (C,)  f32  -- 1x1 conv weight
    # b_ref : SMEM (1,)  f32  -- conv bias
    # x_ref : VMEM (C, tS)    -- input slab, spatial on lanes
    # o_ref : VMEM (C, tS)    -- output slab (lane-dense store)
    x = x_ref[...]                                   # native dtype (C, tS)
    C = x.shape[0]
    # Channel reduction on the VPU: scalar-broadcast FMA per channel row.
    # Kept OFF the MXU on purpose (an N=1 matvec wastes the systolic array).
    # Up to 4 independent partial sums so the 4 VALU slots can co-issue and
    # the add chain isn't C-deep; logits accumulate in f32.
    n_acc = min(4, C)
    partial = []
    for a in range(n_acc):                           # static unroll, C is small
        acc = x[a:a + 1, :].astype(jnp.float32) * w_ref[a]
        for c in range(a + n_acc, C, n_acc):
            acc = acc + x[c:c + 1, :].astype(jnp.float32) * w_ref[c]
        partial.append(acc)
    logits = partial[0]
    for a in range(1, n_acc):
        logits = logits + partial[a]
    logits = logits + b_ref[0]
    attn = jax.nn.sigmoid(logits)                    # (1, tS) f32, EUP
    # Gate every channel row in the input's own dtype (bf16 stays bf16).
    o_ref[...] = (x * attn.astype(x.dtype)).astype(o_ref.dtype)


def _vmem_capacity_bytes():
    """Per-core VMEM capacity; conservative (v7x = 64 MiB) if the query fails."""
    try:
        cap = int(getattr(pltpu.get_tpu_info(), "vmem_capacity_bytes"))
        if cap > 0:
            return cap
    except Exception:
        pass
    return 64 << 20


def _choose_spatial_tile(S, C, itemsize, vmem_capacity, B):
    """Largest lane-dense spatial tile, sized against the PADDED VMEM footprint.

    Returns (tS, n_s, padded_block_bytes). n_s = cdiv(S, tS); a ragged last
    block (masked tail store) is allowed when S isn't a multiple of 128.
    """
    # Sub-32-bit dtypes pack along sublanes: the second-minor dim is physically
    # padded to 8 (f32) / 16 (bf16) / 32 (int8) rows, so size against that.
    min_sub = max(8, 8 * (4 // itemsize))
    padded_c = _cdiv(C, min_sub) * min_sub

    if S < 128:
        tS = S                                       # full-extent block: always legal
    else:
        # Generation-aware per-block byte target (padded). Pure HBM streaming:
        # bigger blocks amortize the ~0.35 us grid-step overhead. v7x (3.2 TB/s
        # HBM, 64 MiB VMEM) -> ~5 MiB; v5e/v6e (128 MiB VMEM) -> ~6 MiB.
        target = (5 << 20) if vmem_capacity <= (64 << 20) else (6 << 20)
        bytes_per_128 = padded_c * itemsize * 128    # one 128-lane chunk of tS
        n128 = max(1, target // bytes_per_128)
        tS = min(int(n128) * 128, (S // 128) * 128)  # 128-aligned, <= S rounded down
        tS = max(128, tS)

    n_s = _cdiv(S, tS)

    # v7x has 2 TensorCores and shards "parallel" grid axes across them:
    # never leave the grid with a single block when a split is possible.
    if B * n_s < 2 and S >= 256:
        tS = max(128, (_cdiv(S, 2) // 128) * 128)
        n_s = _cdiv(S, tS)

    padded_block = padded_c * tS * itemsize
    return tS, n_s, padded_block


@functools.partial(jax.jit, static_argnames=("in_place",))
def attention_module(x, weight, bias, *, in_place=False):
    """x: (B, C, H, W) NCHW; weight: (1, C, 1, 1); bias: (1,) — nn.Conv2d(C, 1, 1).

    Set in_place=True only when the caller donates x (gates x3 in place via
    input_output_aliases); otherwise XLA would insert a defensive copy.
    """
    B, C, H, W = x.shape
    S = H * W
    x3 = x.reshape(B, C, S)                          # free view (contiguous), no transpose

    w1 = weight.reshape(C).astype(jnp.float32)       # (C,) -> SMEM
    b1 = bias.reshape(1).astype(jnp.float32)         # (1,) -> SMEM

    itemsize = jnp.dtype(x.dtype).itemsize
    vmem_capacity = _vmem_capacity_bytes()
    tS, n_s, padded_block = _choose_spatial_tile(S, C, itemsize, vmem_capacity, B)

    # in + out, double-buffered, plus headroom. Explicitly raising the scoped
    # limit covers v5e's 16 MiB default; the cap keeps us inside physical VMEM
    # on every generation (64 MiB on v7x).
    vmem_limit = 4 * padded_block + (4 << 20)
    vmem_limit = max(vmem_limit, 32 << 20)
    vmem_limit = min(vmem_limit, int(vmem_capacity * 0.85))

    cost = pl.CostEstimate(
        flops=(2 * C + 1) * B * S,                   # C-term FMA + gating multiply
        transcendentals=B * S,                       # one sigmoid per pixel
        bytes_accessed=2 * B * C * S * itemsize + (C + 1) * 4,
    )

    extra = {}
    if in_place:
        extra["input_output_aliases"] = {2: 0}       # write the gate over x3

    out3 = pl.pallas_call(
        _attention_kernel,
        out_shape=jax.ShapeDtypeStruct((B, C, S), x.dtype),
        grid=(B, n_s),
        in_specs=[
            pl.BlockSpec(memory_space=pltpu.MemorySpace.SMEM),       # weight (resident)
            pl.BlockSpec(memory_space=pltpu.MemorySpace.SMEM),       # bias   (resident)
            pl.BlockSpec((None, C, tS), lambda b, s: (b, 0, s)),     # x slab
        ],
        out_specs=pl.BlockSpec((None, C, tS), lambda b, s: (b, 0, s)),
        compiler_params=pltpu.CompilerParams(
            dimension_semantics=("parallel", "parallel"),
            vmem_limit_bytes=int(vmem_limit)),
        cost_estimate=cost,
        **extra,
    )(w1, b1, x3)

    return out3.reshape(B, C, H, W)                  # free view back to NCHW


def _reference(x, weight, bias):
    # plain-JAX reference of the PyTorch forward (1x1 conv + sigmoid + gate)
    logits = jnp.einsum("bchw,c->bhw", x, weight.reshape(-1)) + bias[0]
    attn = jax.nn.sigmoid(logits)[:, None, :, :]
    return x * attn


if __name__ == "__main__":
    key = jax.random.PRNGKey(0)
    kx, kw, kb = jax.random.split(key, 3)

    B, C, H, W = 2, 4, 16, 16
    x = jax.random.normal(kx, (B, C, H, W), dtype=jnp.float32)
    # deterministic "conv" parameters: nn.Conv2d(C, 1, kernel_size=1)
    weight = jax.random.normal(kw, (1, C, 1, 1), dtype=jnp.float32) * 0.1
    bias = jax.random.normal(kb, (1,), dtype=jnp.float32) * 0.1

    out = attention_module(x, weight, bias)
    out = jax.block_until_ready(out)

    ref = _reference(x, weight, bias)
    assert out.shape == (B, C, H, W)
    assert jnp.allclose(out, ref, atol=1e-5, rtol=1e-5), "mismatch vs reference"

    print("KERNEL_OK")
</pallas_src>

<mosaic_0001>
module attributes {stable_mosaic.version = 11 : i64} {
  func.func @_attention_kernel(%arg0: i32, %arg1: i32, %arg2: memref<4xf32, #tpu.memory_space<smem>>, %arg3: memref<1xf32, #tpu.memory_space<smem>>, %arg4: memref<1x4x256xf32, #tpu.memory_space<vmem>>, %arg5: memref<1x4x256xf32, #tpu.memory_space<vmem>>) attributes {dimension_semantics = [#tpu.dimension_semantics<parallel>, #tpu.dimension_semantics<parallel>], iteration_bounds = array<i64: 2, 1>, scalar_prefetch = 0 : i64, scratch_operands = 0 : i64, tpu.core_type = #tpu.core_type<tc>, window_params = [{transform_indices = @transform_0, window_bounds = array<i64: 4>}, {transform_indices = @transform_1, window_bounds = array<i64: 1>}, {transform_indices = @transform_2, window_bounds = array<i64: 1, 4, 256>}, {transform_indices = @transform_3, window_bounds = array<i64: 1, 4, 256>}]} {
    %c0 = arith.constant 0 : index
    %c0_0 = arith.constant 0 : index
    %c0_1 = arith.constant 0 : index
    %0 = vector.load %arg4[%c0, %c0_0, %c0_1] : memref<1x4x256xf32, #tpu.memory_space<vmem>>, vector<1x4x256xf32>
    %1 = vector.shape_cast %0 : vector<1x4x256xf32> to vector<4x256xf32>
    %2 = vector.extract_strided_slice %1 {offsets = [0, 0], sizes = [1, 256], strides = [1, 1]} : vector<4x256xf32> to vector<1x256xf32>
    %c0_2 = arith.constant 0 : index
    %3 = memref.load %arg2[%c0_2] : memref<4xf32, #tpu.memory_space<smem>>
    %4 = vector.broadcast %3 : f32 to vector<1x256xf32>
    %5 = arith.mulf %2, %4 : vector<1x256xf32>
    %6 = vector.extract_strided_slice %1 {offsets = [1, 0], sizes = [1, 256], strides = [1, 1]} : vector<4x256xf32> to vector<1x256xf32>
    %c1 = arith.constant 1 : index
    %7 = memref.load %arg2[%c1] : memref<4xf32, #tpu.memory_space<smem>>
    %8 = vector.broadcast %7 : f32 to vector<1x256xf32>
    %9 = arith.mulf %6, %8 : vector<1x256xf32>
    %10 = vector.extract_strided_slice %1 {offsets = [2, 0], sizes = [1, 256], strides = [1, 1]} : vector<4x256xf32> to vector<1x256xf32>
    %c2 = arith.constant 2 : index
    %11 = memref.load %arg2[%c2] : memref<4xf32, #tpu.memory_space<smem>>
    %12 = vector.broadcast %11 : f32 to vector<1x256xf32>
    %13 = arith.mulf %10, %12 : vector<1x256xf32>
    %14 = vector.extract_strided_slice %1 {offsets = [3, 0], sizes = [1, 256], strides = [1, 1]} : vector<4x256xf32> to vector<1x256xf32>
    %c3 = arith.constant 3 : index
    %15 = memref.load %arg2[%c3] : memref<4xf32, #tpu.memory_space<smem>>
    %16 = vector.broadcast %15 : f32 to vector<1x256xf32>
    %17 = arith.mulf %14, %16 : vector<1x256xf32>
    %18 = arith.addf %5, %9 : vector<1x256xf32>
    %19 = arith.addf %18, %13 : vector<1x256xf32>
    %20 = arith.addf %19, %17 : vector<1x256xf32>
    %c0_3 = arith.constant 0 : index
    %21 = memref.load %arg3[%c0_3] : memref<1xf32, #tpu.memory_space<smem>>
    %22 = vector.broadcast %21 : f32 to vector<1x256xf32>
    %23 = arith.addf %20, %22 : vector<1x256xf32>
    %24 = arith.negf %23 : vector<1x256xf32>
    %25 = math.exp %24 : vector<1x256xf32>
    %cst = arith.constant 1.000000e+00 : f32
    %26 = vector.broadcast %cst : f32 to vector<1x256xf32>
    %27 = arith.addf %26, %25 : vector<1x256xf32>
    %28 = arith.divf %26, %27 : vector<1x256xf32>
    %29 = vector.broadcast %28 : vector<1x256xf32> to vector<4x256xf32>
    %30 = arith.mulf %1, %29 : vector<4x256xf32>
    %c0_4 = arith.constant 0 : index
    %c0_5 = arith.constant 0 : index
    %c0_6 = arith.constant 0 : index
    %31 = vector.load %arg5[%c0_4, %c0_5, %c0_6] : memref<1x4x256xf32, #tpu.memory_space<vmem>>, vector<1x4x256xf32>
    %32 = vector.shape_cast %31 : vector<1x4x256xf32> to vector<4x256xf32>
    %33 = vector.shape_cast %30 : vector<4x256xf32> to vector<1x4x256xf32>
    tpu.vector_store %arg5[%c0_4, %c0_5, %c0_6], %33 {strides = array<i32>} : memref<1x4x256xf32, #tpu.memory_space<vmem>>, vector<1x4x256xf32>,
    return
  }
  func.func @transform_0(%arg0: i32, %arg1: i32) -> i32 {
    %c0_i32 = arith.constant 0 : i32
    %c0_i32_0 = arith.constant 0 : i32
    return %c0_i32 : i32
  }
  func.func @transform_1(%arg0: i32, %arg1: i32) -> i32 {
    %c0_i32 = arith.constant 0 : i32
    %c0_i32_0 = arith.constant 0 : i32
    return %c0_i32 : i32
  }
  func.func @transform_2(%arg0: i32, %arg1: i32) -> (i32, i32, i32) {
    %c0_i32 = arith.constant 0 : i32
    %c0_i32_0 = arith.constant 0 : i32
    return %arg0, %c0_i32, %arg1 : i32, i32, i32
  }
  func.func @transform_3(%arg0: i32, %arg1: i32) -> (i32, i32, i32) {
    %c0_i32 = arith.constant 0 : i32
    %c0_i32_0 = arith.constant 0 : i32
    return %arg0, %c0_i32, %arg1 : i32, i32, i32
  }
}

</mosaic_0001>

<llo_original>
// kernel: attention_module.1
$region0: #{attention_module.1}
  #allocation0 [shape = 'u32[]', space=smem, size = 0x4, offset = 0x4, fixed_abs, tag = 'smem constant byte address 0x4 - core index']
  #allocation1 [shape = 'u32[144,128]{1,0:T(1,128)}', space=vmem, size = 0x12000, scoped, tag = 'internal scratch']
  #allocation2 [shape = 'f32[1]{0:T(128)S(6)}', space=smem, size = 0x200, scoped, tag = 'scoped memory for attention_module.1']
  %s0 = inlined_call_operand.vmem [shape: f32[4], index: 0, kind: input, shape index: {}]
  %s1 = inlined_call_operand.<no memory space> [shape: f32[1], index: 1, kind: input, shape index: {}]
  %s2 = inlined_call_operand.vmem [shape: f32[2,4,256], index: 2, kind: input, shape index: {}]
  %s3 = inlined_call_operand.vmem [shape: f32[2,4,256], index: 3, kind: output, shape index: {}]
  %s4 = sld [smem:[#allocation0]]
  $region49: #{attention_module.1} parent=0
    _
  %s6 = ssub.s32 1, %s4
  %s7 = scalar_select 0, %s6, %s4
  %8 = sst [smem:[#allocation2]] %s1
  $region1: #{attention_module.1} parent=0
    #allocation3 [shape = 'u8[512]{0}', space=smem, size = 0x200, scoped, tag = 'input window, operand 0, single buffered']
    #allocation4 [shape = 's32[2]{0}', space=sflag, size = 0x8, scoped, tag = 'scoped memory for attention_module.1']
    %9 = vsyncpa [#allocation4], 0
    loop: start=0, step=1, limit=4
    $region2: #{attention_module.1} parent=1 // loop_pre_header
      _
    $region3: #{attention_module.1} parent=1 // loop_header
      %s11 = sphi 0, %s15
      %p12 = scmp.ge.s32.totalorder %s11, 4
      %s18 = sphi 0, %s30
      %s19 = sphi 0, %s26
      %s20 = sphi 0, %s18
      %s21 = sphi 0, %s19
      %s22 = sphi 0, %s20
      %s23 = sphi 0, %s21
      %s31 = sphi 0, %s31
      %s33 = sphi 0, %s31
      %s34 = sphi 0, %s33
      %s48 = sphi 0, %s34
      %s52 = sphi 0, %s52
      %s54 = sphi 0, %s52
      %s55 = sphi 0, %s54
      %s69 = sphi 0, %s55
      %s77 = sphi 0, %s79
      %s80 = sphi 0, %s77
      %s81 = sphi 0, %s80
      %s97 = sphi 0, %s81
      %s105 = sphi 0, %s107
      %s108 = sphi 0, %s105
      %s109 = sphi 0, %s108
      %s125 = sphi 0, %s109
    $region4: #{attention_module.1} parent=1 // loop_header_branch
      %14 = sbr.rel (%p12) target = $region8
    $region5: #{attention_module.1} parent=1 // loop_body
      %s16 = ssub.s32 %s11, 1
      %s17 = ssub.s32 %s11, 2
      %s24 = sadd.s32 1, %s19
      %p25 = scmp.ge.s32.totalorder %s24, 1
      %s26 = scalar_select %p25, 0, %s24
      %s27 = sadd.s32 1, %s18
      %s28 = scalar_select %p25, %s27, %s18
      %p29 = scmp.ge.s32.totalorder %s28, 2
      %s30 = scalar_select %p29, 0, %s28
      %s32 = sadd.s32 %s31, 1
      %p35 = scmp.eq.s32.totalorder %s11, 1
      %p36 = scmp.ne.s32.totalorder %s31, %s33
      %p37 = scmp.eq.s32.totalorder %s11, 0
      %p38 = por %p36, %p37
      %p39 = scmp.ne.s32.totalorder %s31, %s33
      %p40 = scmp.eq.s32.totalorder %s16, 1
      %p41 = por %p39, %p40
      %p42 = scmp.ne.s32.totalorder %s33, %s34
      %p43 = scmp.eq.s32.totalorder %s16, 0
      %p44 = por %p42, %p43
      %p45 = scmp.ne.s32.totalorder %s33, %s34
      %p46 = scmp.eq.s32.totalorder %s17, 1
      %p47 = por %p45, %p46
      %p49 = scmp.ne.s32.totalorder %s34, %s48
      %p50 = scmp.eq.s32.totalorder %s17, 0
      %p51 = por %p49, %p50
      %s53 = sadd.s32 %s52, 1
      %p56 = scmp.eq.s32.totalorder %s11, 1
      %p57 = scmp.ne.s32.totalorder %s52, %s54
      %p58 = scmp.eq.s32.totalorder %s11, 0
      %p59 = por %p57, %p58
      %p60 = scmp.ne.s32.totalorder %s52, %s54
      %p61 = scmp.eq.s32.totalorder %s16, 1
      %p62 = por %p60, %p61
      %p63 = scmp.ne.s32.totalorder %s54, %s55
      %p64 = scmp.eq.s32.totalorder %s16, 0
      %p65 = por %p63, %p64
      %p66 = scmp.ne.s32.totalorder %s54, %s55
      %p67 = scmp.eq.s32.totalorder %s17, 1
      %p68 = por %p66, %p67
      %p70 = scmp.ne.s32.totalorder %s55, %s69
      %p71 = scmp.eq.s32.totalorder %s17, 0
      %p72 = por %p70, %p71
      %s73 = ssub.s32 %s18, %s30
      %s74 = ssub.s32 %s19, %s26
      %s75 = sor.u32 %s73, %s74
      %p76 = scmp.eq.s32.totalorder %s75, 0
      %s78 = sadd.s32 %s77, 1
      %s79 = scalar_select %p76, %s77, %s78
      %p82 = pneg %p76
      %p83 = scmp.eq.s32.totalorder %s11, 1
      %p84 = por %p82, %p83
      %p85 = scmp.ne.s32.totalorder %s77, %s80
      %p86 = scmp.eq.s32.totalorder %s11, 0
      %p87 = por %p85, %p86
      %p88 = scmp.ne.s32.totalorder %s77, %s80
      %p89 = scmp.eq.s32.totalorder %s16, 1
      %p90 = por %p88, %p89
      %p91 = scmp.ne.s32.totalorder %s80, %s81
      %p92 = scmp.eq.s32.totalorder %s16, 0
      %p93 = por %p91, %p92
      %p94 = scmp.ne.s32.totalorder %s80, %s81
      %p95 = scmp.eq.s32.totalorder %s17, 1
      %p96 = por %p94, %p95
      %p98 = scmp.ne.s32.totalorder %s81, %s97
      %p99 = scmp.eq.s32.totalorder %s17, 0
      %p100 = por %p98, %p99
      %s101 = ssub.s32 %s18, %s30
      %s102 = ssub.s32 %s19, %s26
      %s103 = sor.u32 %s101, %s102
      %p104 = scmp.eq.s32.totalorder %s103, 0
      %s106 = sadd.s32 %s105, 1
      %s107 = scalar_select %p104, %s105, %s106
      %p110 = pneg %p104
      %p111 = scmp.eq.s32.totalorder %s11, 1
      %p112 = por %p110, %p111
      %p113 = scmp.ne.s32.totalorder %s105, %s108
      %p114 = scmp.eq.s32.totalorder %s11, 0
      %p115 = por %p113, %p114
      %p116 = scmp.ne.s32.totalorder %s105, %s108
      %p117 = scmp.eq.s32.totalorder %s16, 1
      %p118 = por %p116, %p117
      %p119 = scmp.ne.s32.totalorder %s108, %s109
      %p120 = scmp.eq.s32.totalorder %s16, 0
      %p121 = por %p119, %p120
      %p122 = scmp.ne.s32.totalorder %s108, %s109
      %p123 = scmp.eq.s32.totalorder %s17, 1
      %p124 = por %p122, %p123
      %p126 = scmp.ne.s32.totalorder %s109, %s125
      %p127 = scmp.eq.s32.totalorder %s17, 0
      %p128 = por %p126, %p127
      %p129 = scmp.le.s32.totalorder 1, %s11
      %p130 = scmp.lt.s32.totalorder %s11, 3
      %p131 = pnand %p129, %p130
      %p132 = pneg %p131
      // Predicated region
      $region9: #{attention_module.1} parent=5 // pred_check
        _
      $region10: #{attention_module.1} parent=5 // pred_check_branch
        %134 = sbr.rel (%p131) target = $region12
      $region11: #{attention_module.1} parent=5 // pred_region
        %s135 = ssub.s32 %s11, 1
        // Predicated region
        $region13: #{attention_module.1} parent=11 // pred_check
          %p136 = pneg %p44
        $region14: #{attention_module.1} parent=11 // pred_check_branch
          %138 = sbr.rel (%p136) target = $region16
        $region15: #{attention_module.1} parent=11 // pred_region
          %s140 = ssub.s32 16, 16
          %141 = vsyncadd [#allocation4], %s140
          %s143 = sshll.u32 %s0, 4
          %s144 = int_to_ptr.vmem [resolvable:$true] %s143
          %146 = dma.vmem_to_smem %s144, 16, [#allocation3], [#allocation4]
        $region16: #{attention_module.1} parent=11 // pred_fallthru
          _
        // Predicated region
        $region17: #{attention_module.1} parent=11 // pred_check
          %p147 = pneg %p65
        $region18: #{attention_module.1} parent=11 // pred_check_branch
          %149 = sbr.rel (%p147) target = $region20
        $region19: #{attention_module.1} parent=11 // pred_region
          _
        $region20: #{attention_module.1} parent=11 // pred_fallthru
          _
      $region12: #{attention_module.1} parent=5 // pred_fallthru
        _
      %p150 = scmp.lt.s32.totalorder %s11, 2
      // Predicated region
      $region21: #{attention_module.1} parent=5 // pred_check
        %p151 = pneg %p150
      $region22: #{attention_module.1} parent=5 // pred_check_branch
        %153 = sbr.rel (%p151) target = $region24
      $region23: #{attention_module.1} parent=5 // pred_region
        // Predicated region
        $region25: #{attention_module.1} parent=23 // pred_check
          %p154 = pneg %p87
        $region26: #{attention_module.1} parent=23 // pred_check_branch
          %156 = sbr.rel (%p154) target = $region28
        $region27: #{attention_module.1} parent=23 // pred_region
          %s157 = smul.u32 2, %s19
          %p158 = scmp.lt.s32.totalorder %s18, 1
          %s159 = scalar_select %p158, %s18, 1
          %p160 = scmp.lt.s32.totalorder %s157, 1
          %s161 = scalar_select %p160, %s157, 1
          %s162 = smul.addr %s159, 2
          %s163 = sadd.s32 %s161, %s162
          %s164 = smul.addr %s163, 4
          %s165 = scalar_lea.vmem %s2, %s164
          %s166 = smul.u32 2, %s19
        $region28: #{attention_module.1} parent=23 // pred_fallthru
          _
      $region24: #{attention_module.1} parent=5 // pred_fallthru
        _
      %p167 = scmp.le.s32.totalorder 1, %s11
      %p168 = scmp.lt.s32.totalorder %s11, 3
      %p169 = pnand %p167, %p168
      %p170 = pneg %p169
      // Predicated region
      $region29: #{attention_module.1} parent=5 // pred_check
        _
      $region30: #{attention_module.1} parent=5 // pred_check_branch
        %172 = sbr.rel (%p169) target = $region32
      $region31: #{attention_module.1} parent=5 // pred_region
        %s173 = ssub.s32 %s11, 1
        // Predicated region
        $region33: #{attention_module.1} parent=31 // pred_check
          %p174 = pneg %p44
        $region34: #{attention_module.1} parent=31 // pred_check_branch
          %176 = sbr.rel (%p174) target = $region36
        $region35: #{attention_module.1} parent=31 // pred_region
          %177 = dma.done [#allocation4], 16
        $region36: #{attention_module.1} parent=31 // pred_fallthru
          _
        %178 = sfence
        %p179 = pneg %p44
        %p180 = pneg %p41
        %p181 = pneg %p65
        %p182 = pneg %p62
        %s183 = smul.u32 2, %s21
        %p184 = scmp.lt.s32.totalorder %s20, 1
        %s185 = scalar_select %p184, %s20, 1
        %p186 = scmp.lt.s32.totalorder %s183, 1
        %s187 = scalar_select %p186, %s183, 1
        %s188 = smul.addr %s185, 2
        %s189 = sadd.s32 %s187, %s188
        %s190 = smul.addr %s189, 4
        %s191 = scalar_lea.vmem %s2, %s190
        %p192 = pneg %p93
        %p193 = pneg %p90
        %p194 = pneg %p121
        %p195 = pneg %p118
        %s196 = smul.u32 2, %s21
        %p197 = scmp.lt.s32.totalorder %s20, 1
        %s198 = scalar_select %p197, %s20, 1
        %p199 = scmp.lt.s32.totalorder %s196, 1
        %s200 = scalar_select %p199, %s196, 1
        %s201 = smul.addr %s198, 2
        %s202 = sadd.s32 %s200, %s201
        %s203 = smul.addr %s202, 4
        %s204 = scalar_lea.vmem %s3, %s203
        %s205 = smul.u32 2, %s21
        %p206 = scmp.lt.s32.totalorder %s20, 1
        %s207 = scalar_select %p206, %s20, 1
        %p208 = scmp.lt.s32.totalorder %s205, 1
        %s209 = scalar_select %p208, %s205, 1
        %s210 = smul.addr %s207, 2
        %s211 = sadd.s32 %s209, %s210
        %s212 = smul.addr %s211, 4
        %s213 = scalar_lea.vmem %s2, %s212
        %s214 = smul.u32 2, %s21
        %s215 = smul.u32 2, %s21
        %p216 = scmp.lt.s32.totalorder %s20, 1
        %s217 = scalar_select %p216, %s20, 1
        %p218 = scmp.lt.s32.totalorder %s215, 1
        %s219 = scalar_select %p218, %s215, 1
        %s220 = smul.addr %s217, 2
        %s221 = sadd.s32 %s219, %s220
        %s222 = smul.addr %s221, 4
        %s223 = scalar_lea.vmem %s3, %s222
        %s224 = smul.u32 2, %s21
        %v225 = vld [vmem:[%s213] sm:$0xff]
        %s226 = sld [smem:[#allocation3]]
        %v227 = vstv %s226
        %v228 = vmul.f32 %v225, %v227
        %s229 = sld [smem:[#allocation3 + $0x1]]
        %v230 = vstv %s229
        %v231 = vmul.f32 %v225, %v230
        %s232 = sld [smem:[#allocation3 + $0x2]]
        %v233 = vstv %s232
        %v234 = vmul.f32 %v225, %v233
        %s235 = sld [smem:[#allocation3 + $0x3]]
        %v236 = vstv %s235
        %v237 = vmul.f32 %v225, %v236
        %v239 = vrot.slane %v231, 5
        %v240 = vrot.slane %v239, 4
        %v242 = vadd.f32 %v228, %v240
        %v244 = vrot.slane %v234, 6
        %v245 = vrot.slane %v244, 4
        %v247 = vadd.f32 %v242, %v245
        %v249 = vrot.slane %v237, 7
        %v250 = vrot.slane %v249, 4
        %v252 = vadd.f32 %v247, %v250
        %s253 = sld [smem:[#allocation2]]
        %v254 = vstv %s253
        %v255 = vadd.f32 %v252, %v254
        %v256 = vxor.u32 %v255, 2147483648
        %v257 = vmul.f32 %v256, 1.442695
        %v258 = vpow.pop %v257
        %v259 = vadd.f32 %v258, 1.0
        %v260 = vrcp.pop %v259
        %v261 = vmul.f32 1.0, %v260
        %v263 = vlaneseq
        %v264 = vshrl.u32 %v263, 7
        %v265 = vsub.s32 0, %v264
        %v266 = vrot.slane %v261, %v265
        %v267 = vlaneseq
        %v268 = vshrl.u32 %v267, 7
        %v269 = vsub.s32 4, %v268
        %v270 = vrot.slane %v261, %v269
        %v273 = vlaneseq
        %v274 = vshrl.u32 %v273, 7
        %v275 = vsub.s32 0, %v274
        %v276 = vrot.slane %v266, %v275
        %v277 = vlaneseq
        %v278 = vshrl.u32 %v277, 7
        %v279 = vsub.s32 0, %v278
        %v280 = vrot.slane %v270, %v279
        %v283 = vcombine.low %v276, %v280
        %v285 = vmul.f32 %v225, %v283
        %286 = vst [vmem:[%s223] sm:$0xff] %v285
        %s287 = smul.u32 2, %s21
        %p288 = scmp.lt.s32.totalorder %s20, 1
        %s289 = scalar_select %p288, %s20, 1
        %p290 = scmp.lt.s32.totalorder %s287, 1
        %s291 = scalar_select %p290, %s287, 1
        %s292 = smul.addr %s289, 2
        %s293 = sadd.s32 %s291, %s292
        %s294 = smul.addr %s293, 4
        %s295 = scalar_lea.vmem %s3, %s294
        // Predicated region
        $region37: #{attention_module.1} parent=31 // pred_check
          %p296 = pneg %p118
        $region38: #{attention_module.1} parent=31 // pred_check_branch
          %298 = sbr.rel (%p296) target = $region40
        $region39: #{attention_module.1} parent=31 // pred_region
          %s299 = smul.u32 2, %s21
        $region40: #{attention_module.1} parent=31 // pred_fallthru
          _
      $region32: #{attention_module.1} parent=5 // pred_fallthru
        _
      %p300 = scmp.le.s32.totalorder 2, %s11
      // Predicated region
      $region41: #{attention_module.1} parent=5 // pred_check
        %p301 = pneg %p300
      $region42: #{attention_module.1} parent=5 // pred_check_branch
        %303 = sbr.rel (%p301) target = $region44
      $region43: #{attention_module.1} parent=5 // pred_region
        %s304 = ssub.s32 %s11, 2
        // Predicated region
        $region45: #{attention_module.1} parent=43 // pred_check
          %p305 = pneg %p124
        $region46: #{attention_module.1} parent=43 // pred_check_branch
          %307 = sbr.rel (%p305) target = $region48
        $region47: #{attention_module.1} parent=43 // pred_region
          %s308 = smul.u32 2, %s23
          %p309 = scmp.lt.s32.totalorder %s22, 1
          %s310 = scalar_select %p309, %s22, 1
          %p311 = scmp.lt.s32.totalorder %s308, 1
          %s312 = scalar_select %p311, %s308, 1
          %s313 = smul.addr %s310, 2
          %s314 = sadd.s32 %s312, %s313
          %s315 = smul.addr %s314, 4
          %s316 = scalar_lea.vmem %s3, %s315
        $region48: #{attention_module.1} parent=43 // pred_fallthru
          _
      $region44: #{attention_module.1} parent=5 // pred_fallthru
        _
    $region6: #{attention_module.1} parent=1 // loop_footer
      %s15 = sadd.s32 1, %s11
    $region7: #{attention_module.1} parent=1 // loop_footer_branch
      %10 = sbr.rel target = $region3
    $region8: #{attention_module.1} parent=1 // loop_exit
      _
    %317 = vsyncpa [#allocation4], 1
    %s318 = scalar_lea.sflag [#allocation4], 1
    %319 = vsyncpa %s318, 1

</llo_original>
